<compile_context>
chip_gen: v5e
topology: v5e:2x2
jax: 0.10.0
libtpu: 0.0.40
codegen_flags: <defaults>
</compile_context>

<pallas_src>
import functools

import jax
import jax.numpy as jnp
from jax.experimental import pallas as pl
from jax.experimental.pallas import tpu as pltpu


def _round_up(v, m):
    return ((v + m - 1) // m) * m


def _ffn_kernel(x_ref, w1_ref, b1_ref, w2_ref, b2_ref, o_ref, acc_ref):
    # x_ref:  (bm, dm_p)    w1_ref: (dm_p, bf)  b1_ref: (1, bf)
    # w2_ref: (bf, dm_p)    b2_ref: (1, dm_p)   o_ref:  (bm, dm_p)
    # acc_ref: (bm, dm_p) f32 accumulator over the d_ff grid axis.
    k = pl.program_id(1)

    @pl.when(k == 0)
    def _init():
        acc_ref[...] = jnp.zeros_like(acc_ref)

    # linear_1 chunk (+ bias) + ReLU: native-dtype MXU matmul, f32 accumulation.
    h = jnp.dot(x_ref[...], w1_ref[...], preferred_element_type=jnp.float32)
    h = jnp.maximum(h + b1_ref[...].astype(jnp.float32), 0.0)

    # Dropout(p=0.5) in inference mode == identity.
    # TODO(synk): training-mode dropout (pltpu.prng_seed + stateful_bernoulli +
    #             1/(1-p) scaling) cannot bit-match torch's RNG; omitted.

    # Partial contribution of this d_ff chunk through linear_2.
    acc_ref[...] += jnp.dot(
        h.astype(w2_ref.dtype), w2_ref[...], preferred_element_type=jnp.float32
    )

    @pl.when(k == pl.num_programs(1) - 1)
    def _finalize():
        o_ref[...] = (acc_ref[...] + b2_ref[...].astype(jnp.float32)).astype(o_ref.dtype)


@functools.partial(jax.jit, static_argnames=("block_m", "block_f"))
def feed_forward(x, w1, b1, w2, b2, *, block_m=256, block_f=512):
    """x: (..., d_model) -> (..., d_model).  W1: (d_model, d_ff), W2: (d_ff, d_model)."""
    orig_shape = x.shape
    d_model = orig_shape[-1]
    d_ff = w1.shape[1]
    x2d = x.reshape(-1, d_model)
    m = x2d.shape[0]

    # Lane-dense last dim (multiple of 128) + sublane-aligned row tiles (multiple of 8).
    d_model_p = _round_up(d_model, 128)
    bm = _round_up(min(block_m, _round_up(m, 8)), 8)
    m_p = _round_up(m, bm)
    bf = _round_up(min(block_f, _round_up(d_ff, 128)), 128)
    d_ff_p = _round_up(d_ff, bf)

    # Zero padding is inert: padded x cols / W1 rows / W2 rows contribute 0,
    # padded output cols / rows are sliced off below.
    x_p = jnp.pad(x2d, ((0, m_p - m), (0, d_model_p - d_model)))
    w1_p = jnp.pad(w1, ((0, d_model_p - d_model), (0, d_ff_p - d_ff)))
    b1_p = jnp.pad(b1.reshape(1, -1), ((0, 0), (0, d_ff_p - d_ff)))
    w2_p = jnp.pad(w2, ((0, d_ff_p - d_ff), (0, d_model_p - d_model)))
    b2_p = jnp.pad(b2.reshape(1, -1), ((0, 0), (0, d_model_p - d_model)))

    grid = (m_p // bm, d_ff_p // bf)  # reduction (d_ff) axis last

    # Explicit VMEM budget: double-buffered tiles + f32 accumulator, with headroom.
    isz = lambda a: jnp.dtype(a.dtype).itemsize
    tile_bytes = (
        bm * d_model_p * isz(x_p)          # x tile
        + d_model_p * bf * isz(w1_p)       # w1 tile
        + bf * isz(b1_p)                   # b1 tile
        + bf * d_model_p * isz(w2_p)       # w2 tile
        + d_model_p * isz(b2_p)            # b2 tile
        + bm * d_model_p * isz(x_p)        # out tile
    )
    est = 2 * tile_bytes + bm * d_model_p * 4
    vmem_limit = int(min(max(2 * est, 32 * 1024 * 1024), 64 * 1024 * 1024))

    out_p = pl.pallas_call(
        _ffn_kernel,
        out_shape=jax.ShapeDtypeStruct((m_p, d_model_p), x.dtype),
        grid_spec=pltpu.PrefetchScalarGridSpec(
            num_scalar_prefetch=0,
            grid=grid,
            in_specs=[
                pl.BlockSpec((bm, d_model_p), lambda i, k: (i, 0)),   # x (resident over k)
                pl.BlockSpec((d_model_p, bf), lambda i, k: (0, k)),   # W1 chunk
                pl.BlockSpec((1, bf), lambda i, k: (0, k)),           # b1 chunk
                pl.BlockSpec((bf, d_model_p), lambda i, k: (k, 0)),   # W2 chunk
                pl.BlockSpec((1, d_model_p), lambda i, k: (0, 0)),    # b2
            ],
            out_specs=pl.BlockSpec((bm, d_model_p), lambda i, k: (i, 0)),
            scratch_shapes=[pltpu.VMEM((bm, d_model_p), jnp.float32)],
        ),
        compiler_params=pltpu.CompilerParams(
            dimension_semantics=("parallel", "arbitrary"),
            vmem_limit_bytes=vmem_limit,
        ),
    )(x_p, w1_p, b1_p, w2_p, b2_p)

    return out_p[:m, :d_model].reshape(orig_shape)


def init_params(key, d_model, d_ff, dtype=jnp.float32):
    """Deterministic init mimicking nn.Linear (uniform +-1/sqrt(fan_in))."""
    k1, k2, k3, k4 = jax.random.split(key, 4)
    bound1 = 1.0 / (d_model ** 0.5)
    bound2 = 1.0 / (d_ff ** 0.5)
    # stored pre-transposed relative to torch's (out_features, in_features)
    w1 = jax.random.uniform(k1, (d_model, d_ff), dtype, -bound1, bound1)
    b1 = jax.random.uniform(k2, (d_ff,), dtype, -bound1, bound1)
    w2 = jax.random.uniform(k3, (d_ff, d_model), dtype, -bound2, bound2)
    b2 = jax.random.uniform(k4, (d_model,), dtype, -bound2, bound2)
    return w1, b1, w2, b2


def feed_forward_ref(x, w1, b1, w2, b2):
    h = jnp.maximum(jnp.dot(x, w1) + b1, 0.0)
    return jnp.dot(h, w2) + b2


if __name__ == "__main__":
    batch, seq, d_model, d_ff = 2, 8, 32, 512

    key = jax.random.PRNGKey(0)
    kx, kp = jax.random.split(key)
    x = jax.random.normal(kx, (batch, seq, d_model), dtype=jnp.float32)
    w1, b1, w2, b2 = init_params(kp, d_model, d_ff)

    out = jax.block_until_ready(feed_forward(x, w1, b1, w2, b2))
    ref = feed_forward_ref(x, w1, b1, w2, b2)

    assert out.shape == (batch, seq, d_model)
    assert jnp.allclose(out, ref, atol=1e-4, rtol=1e-4), "mismatch vs reference"

    print("KERNEL_OK")
</pallas_src>

<mosaic_0001>
module attributes {stable_mosaic.version = 11 : i64} {
  func.func @_ffn_kernel(%arg0: i32, %arg1: i32, %arg2: memref<16x128xf32, #tpu.memory_space<vmem>>, %arg3: memref<128x512xf32, #tpu.memory_space<vmem>>, %arg4: memref<1x512xf32, #tpu.memory_space<vmem>>, %arg5: memref<512x128xf32, #tpu.memory_space<vmem>>, %arg6: memref<1x128xf32, #tpu.memory_space<vmem>>, %arg7: memref<16x128xf32, #tpu.memory_space<vmem>>, %arg8: memref<16x128xf32, #tpu.memory_space<vmem>>) attributes {dimension_semantics = [#tpu.dimension_semantics<parallel>, #tpu.dimension_semantics<arbitrary>], iteration_bounds = array<i64: 1, 1>, scalar_prefetch = 0 : i64, scratch_operands = 1 : i64, tpu.core_type = #tpu.core_type<tc>, window_params = [{transform_indices = @transform_0, window_bounds = array<i64: 16, 128>}, {transform_indices = @transform_1, window_bounds = array<i64: 128, 512>}, {transform_indices = @transform_2, window_bounds = array<i64: 1, 512>}, {transform_indices = @transform_3, window_bounds = array<i64: 512, 128>}, {pipeline_mode = #tpu.pipeline_mode<synchronous>, transform_indices = @transform_4, window_bounds = array<i64: 1, 128>}, {transform_indices = @transform_5, window_bounds = array<i64: 16, 128>}]} {
    %c0_i32 = arith.constant 0 : i32
    %0 = arith.cmpi eq, %arg1, %c0_i32 : i32
    %1 = arith.extui %0 : i1 to i32
    %c0_i32_0 = arith.constant 0 : i32
    %2 = arith.cmpi ne, %1, %c0_i32_0 : i32
    scf.if %2 {
      %cst_16 = arith.constant 0.000000e+00 : f32
      %19 = vector.broadcast %cst_16 : f32 to vector<16x128xf32>
      %c0_17 = arith.constant 0 : index
      %c0_18 = arith.constant 0 : index
      %20 = vector.load %arg8[%c0_17, %c0_18] : memref<16x128xf32, #tpu.memory_space<vmem>>, vector<16x128xf32>
      tpu.vector_store %arg8[%c0_17, %c0_18], %19 {strides = array<i32>} : memref<16x128xf32, #tpu.memory_space<vmem>>, vector<16x128xf32>,
    } else {
    }
    %c0 = arith.constant 0 : index
    %c0_1 = arith.constant 0 : index
    %3 = vector.load %arg2[%c0, %c0_1] : memref<16x128xf32, #tpu.memory_space<vmem>>, vector<16x128xf32>
    %c0_2 = arith.constant 0 : index
    %c0_3 = arith.constant 0 : index
    %4 = vector.load %arg3[%c0_2, %c0_3] : memref<128x512xf32, #tpu.memory_space<vmem>>, vector<128x512xf32>
    %cst = arith.constant dense<0.000000e+00> : vector<16x512xf32>
    %5 = tpu.matmul %3, %4, %cst {dimension_numbers = #tpu.dot_dimension_numbers<[1], [0], [0], [1], [0, 0, 1, 1], [], []>} : vector<16x128xf32>, vector<128x512xf32>, vector<16x512xf32> -> vector<16x512xf32>
    %c0_4 = arith.constant 0 : index
    %c0_5 = arith.constant 0 : index
    %6 = vector.load %arg4[%c0_4, %c0_5] : memref<1x512xf32, #tpu.memory_space<vmem>>, vector<1x512xf32>
    %7 = vector.broadcast %6 : vector<1x512xf32> to vector<16x512xf32>
    %8 = arith.addf %5, %7 : vector<16x512xf32>
    %cst_6 = arith.constant 0.000000e+00 : f32
    %9 = vector.broadcast %cst_6 : f32 to vector<16x512xf32>
    %10 = arith.maximumf %8, %9 : vector<16x512xf32>
    %c0_7 = arith.constant 0 : index
    %c0_8 = arith.constant 0 : index
    %11 = vector.load %arg8[%c0_7, %c0_8] : memref<16x128xf32, #tpu.memory_space<vmem>>, vector<16x128xf32>
    %c0_9 = arith.constant 0 : index
    %c0_10 = arith.constant 0 : index
    %12 = vector.load %arg5[%c0_9, %c0_10] : memref<512x128xf32, #tpu.memory_space<vmem>>, vector<512x128xf32>
    %cst_11 = arith.constant dense<0.000000e+00> : vector<16x128xf32>
    %13 = tpu.matmul %10, %12, %cst_11 {dimension_numbers = #tpu.dot_dimension_numbers<[1], [0], [0], [1], [0, 0, 1, 1], [], []>} : vector<16x512xf32>, vector<512x128xf32>, vector<16x128xf32> -> vector<16x128xf32>
    %14 = arith.addf %11, %13 : vector<16x128xf32>
    %c0_12 = arith.constant 0 : index
    %c0_13 = arith.constant 0 : index
    %15 = vector.load %arg8[%c0_12, %c0_13] : memref<16x128xf32, #tpu.memory_space<vmem>>, vector<16x128xf32>
    tpu.vector_store %arg8[%c0_12, %c0_13], %14 {strides = array<i32>} : memref<16x128xf32, #tpu.memory_space<vmem>>, vector<16x128xf32>,
    %c0_i32_14 = arith.constant 0 : i32
    %16 = arith.cmpi eq, %arg1, %c0_i32_14 : i32
    %17 = arith.extui %16 : i1 to i32
    %c0_i32_15 = arith.constant 0 : i32
    %18 = arith.cmpi ne, %17, %c0_i32_15 : i32
    scf.if %18 {
      %c0_16 = arith.constant 0 : index
      %c0_17 = arith.constant 0 : index
      %19 = vector.load %arg8[%c0_16, %c0_17] : memref<16x128xf32, #tpu.memory_space<vmem>>, vector<16x128xf32>
      %c0_18 = arith.constant 0 : index
      %c0_19 = arith.constant 0 : index
      %20 = vector.load %arg6[%c0_18, %c0_19] : memref<1x128xf32, #tpu.memory_space<vmem>>, vector<1x128xf32>
      %21 = vector.broadcast %20 : vector<1x128xf32> to vector<16x128xf32>
      %22 = arith.addf %19, %21 : vector<16x128xf32>
      %c0_20 = arith.constant 0 : index
      %c0_21 = arith.constant 0 : index
      %23 = vector.load %arg7[%c0_20, %c0_21] : memref<16x128xf32, #tpu.memory_space<vmem>>, vector<16x128xf32>
      tpu.vector_store %arg7[%c0_20, %c0_21], %22 {strides = array<i32>} : memref<16x128xf32, #tpu.memory_space<vmem>>, vector<16x128xf32>,
    } else {
    }
    return
  }
  func.func @transform_0(%arg0: i32, %arg1: i32) -> (i32, i32) {
    %c0_i32 = arith.constant 0 : i32
    %c0_i32_0 = arith.constant 0 : i32
    return %arg0, %c0_i32 : i32, i32
  }
  func.func @transform_1(%arg0: i32, %arg1: i32) -> (i32, i32) {
    %c0_i32 = arith.constant 0 : i32
    %c0_i32_0 = arith.constant 0 : i32
    return %c0_i32, %arg1 : i32, i32
  }
  func.func @transform_2(%arg0: i32, %arg1: i32) -> (i32, i32) {
    %c0_i32 = arith.constant 0 : i32
    %c0_i32_0 = arith.constant 0 : i32
    return %c0_i32, %arg1 : i32, i32
  }
  func.func @transform_3(%arg0: i32, %arg1: i32) -> (i32, i32) {
    %c0_i32 = arith.constant 0 : i32
    %c0_i32_0 = arith.constant 0 : i32
    return %arg1, %c0_i32 : i32, i32
  }
  func.func @transform_4(%arg0: i32, %arg1: i32) -> (i32, i32) {
    %c0_i32 = arith.constant 0 : i32
    %c0_i32_0 = arith.constant 0 : i32
    %c0_i32_1 = arith.constant 0 : i32
    return %c0_i32, %c0_i32_0 : i32, i32
  }
  func.func @transform_5(%arg0: i32, %arg1: i32) -> (i32, i32) {
    %c0_i32 = arith.constant 0 : i32
    %c0_i32_0 = arith.constant 0 : i32
    return %arg0, %c0_i32 : i32, i32
  }
}

</mosaic_0001>

<llo_original>
// kernel: feed_forward.1
$region0: #{feed_forward.1}
  #allocation0 [shape = 'u32[]', space=smem, size = 0x4, offset = 0x4, fixed_abs, tag = 'smem constant byte address 0x4 - core index']
  #allocation1 [shape = 'u32[72,128]{1,0:T(1,128)}', space=vmem, size = 0x9000, scoped, tag = 'internal scratch']
  #allocation2 [shape = 'f32[16,128]{1,0:T(8,128)}', space=vmem, size = 0x2000, scoped, tag = 'scratch operand']
  %s0 = inlined_call_operand.vmem [shape: f32[16,128], index: 0, kind: input, shape index: {}]
  %s1 = inlined_call_operand.vmem [shape: f32[128,512], index: 1, kind: input, shape index: {}]
  %s2 = inlined_call_operand.vmem [shape: f32[1,512], index: 2, kind: input, shape index: {}]
  %s3 = inlined_call_operand.vmem [shape: f32[512,128], index: 3, kind: input, shape index: {}]
  %s4 = inlined_call_operand.vmem [shape: f32[1,128], index: 4, kind: input, shape index: {}]
  %s5 = inlined_call_operand.vmem [shape: f32[16,128], index: 5, kind: output, shape index: {}]
  %s6 = sld [smem:[#allocation0]]
  $region38: #{feed_forward.1} parent=0
    _
  %s8 = ssub.s32 1, %s6
  %s9 = scalar_select 0, %s8, %s6
  // Predicated region
  $region2: #{feed_forward.1} parent=0 // pred_check
    _
  $region3: #{feed_forward.1} parent=0 // pred_check_branch
    %11 = sbr.rel (0) target = $region5
  $region4: #{feed_forward.1} parent=0 // pred_region
    _
  $region5: #{feed_forward.1} parent=0 // pred_fallthru
    _
  // Predicated region
  $region6: #{feed_forward.1} parent=0 // pred_check
    _
  $region7: #{feed_forward.1} parent=0 // pred_check_branch
    %13 = sbr.rel (0) target = $region9
  $region8: #{feed_forward.1} parent=0 // pred_region
    _
  $region9: #{feed_forward.1} parent=0 // pred_fallthru
    _
  // Predicated region
  $region10: #{feed_forward.1} parent=0 // pred_check
    _
  $region11: #{feed_forward.1} parent=0 // pred_check_branch
    %15 = sbr.rel (0) target = $region13
  $region12: #{feed_forward.1} parent=0 // pred_region
    _
  $region13: #{feed_forward.1} parent=0 // pred_fallthru
    _
  // Predicated region
  $region14: #{feed_forward.1} parent=0 // pred_check
    _
  $region15: #{feed_forward.1} parent=0 // pred_check_branch
    %17 = sbr.rel (0) target = $region17
  $region16: #{feed_forward.1} parent=0 // pred_region
    _
  $region17: #{feed_forward.1} parent=0 // pred_fallthru
    _
  // Predicated region
  $region18: #{feed_forward.1} parent=0 // pred_check
    _
  $region19: #{feed_forward.1} parent=0 // pred_check_branch
    %19 = sbr.rel (0) target = $region21
  $region20: #{feed_forward.1} parent=0 // pred_region
    _
  $region21: #{feed_forward.1} parent=0 // pred_fallthru
    _
  %p20 = scmp.eq.s32.totalorder 0, 0
  // Predicated region
  $region22: #{feed_forward.1} parent=0 // pred_check
    %p21 = pneg %p20
  $region23: #{feed_forward.1} parent=0 // pred_check_branch
    %23 = sbr.rel (%p21) target = $region25
  $region24: #{feed_forward.1} parent=0 // pred_region
    %24 = vst [vmem:[#allocation2] sm:$0xff] 0.0
    %25 = vst [vmem:[#allocation2 + $0x8] sm:$0xff] 0.0
  $region25: #{feed_forward.1} parent=0 // pred_fallthru
    _
  %v26 = vld [vmem:[%s0] sm:$0xff]
  %v27 = vld [vmem:[%s0 + $0x8] sm:$0xff]
  %v28 = vld [vmem:[%s1] sm:$0xff]
  %v29 = vld [vmem:[%s1 + $0x8] sm:$0xff]
  %v30 = vld [vmem:[%s1 + $0x10] sm:$0xff]
  %v31 = vld [vmem:[%s1 + $0x18] sm:$0xff]
  %v32 = vld [vmem:[%s1 + $0x20] sm:$0xff]
  %v33 = vld [vmem:[%s1 + $0x28] sm:$0xff]
  %v34 = vld [vmem:[%s1 + $0x30] sm:$0xff]
  %v35 = vld [vmem:[%s1 + $0x38] sm:$0xff]
  %v36 = vld [vmem:[%s1 + $0x40] sm:$0xff]
  %v37 = vld [vmem:[%s1 + $0x48] sm:$0xff]
  %v38 = vld [vmem:[%s1 + $0x50] sm:$0xff]
  %v39 = vld [vmem:[%s1 + $0x58] sm:$0xff]
  %v40 = vld [vmem:[%s1 + $0x60] sm:$0xff]
  %v41 = vld [vmem:[%s1 + $0x68] sm:$0xff]
  %v42 = vld [vmem:[%s1 + $0x70] sm:$0xff]
  %v43 = vld [vmem:[%s1 + $0x78] sm:$0xff]
  %v44 = vld [vmem:[%s1 + $0x80] sm:$0xff]
  %v45 = vld [vmem:[%s1 + $0x88] sm:$0xff]
  %v46 = vld [vmem:[%s1 + $0x90] sm:$0xff]
  %v47 = vld [vmem:[%s1 + $0x98] sm:$0xff]
  %v48 = vld [vmem:[%s1 + $0xa0] sm:$0xff]
  %v49 = vld [vmem:[%s1 + $0xa8] sm:$0xff]
  %v50 = vld [vmem:[%s1 + $0xb0] sm:$0xff]
  %v51 = vld [vmem:[%s1 + $0xb8] sm:$0xff]
  %v52 = vld [vmem:[%s1 + $0xc0] sm:$0xff]
  %v53 = vld [vmem:[%s1 + $0xc8] sm:$0xff]
  %v54 = vld [vmem:[%s1 + $0xd0] sm:$0xff]
  %v55 = vld [vmem:[%s1 + $0xd8] sm:$0xff]
  %v56 = vld [vmem:[%s1 + $0xe0] sm:$0xff]
  %v57 = vld [vmem:[%s1 + $0xe8] sm:$0xff]
  %v58 = vld [vmem:[%s1 + $0xf0] sm:$0xff]
  %v59 = vld [vmem:[%s1 + $0xf8] sm:$0xff]
  %v60 = vld [vmem:[%s1 + $0x100] sm:$0xff]
  %v61 = vld [vmem:[%s1 + $0x108] sm:$0xff]
  %v62 = vld [vmem:[%s1 + $0x110] sm:$0xff]
  %v63 = vld [vmem:[%s1 + $0x118] sm:$0xff]
  %v64 = vld [vmem:[%s1 + $0x120] sm:$0xff]
  %v65 = vld [vmem:[%s1 + $0x128] sm:$0xff]
  %v66 = vld [vmem:[%s1 + $0x130] sm:$0xff]
  %v67 = vld [vmem:[%s1 + $0x138] sm:$0xff]
  %v68 = vld [vmem:[%s1 + $0x140] sm:$0xff]
  %v69 = vld [vmem:[%s1 + $0x148] sm:$0xff]
  %v70 = vld [vmem:[%s1 + $0x150] sm:$0xff]
  %v71 = vld [vmem:[%s1 + $0x158] sm:$0xff]
  %v72 = vld [vmem:[%s1 + $0x160] sm:$0xff]
  %v73 = vld [vmem:[%s1 + $0x168] sm:$0xff]
  %v74 = vld [vmem:[%s1 + $0x170] sm:$0xff]
  %v75 = vld [vmem:[%s1 + $0x178] sm:$0xff]
  %v76 = vld [vmem:[%s1 + $0x180] sm:$0xff]
  %v77 = vld [vmem:[%s1 + $0x188] sm:$0xff]
  %v78 = vld [vmem:[%s1 + $0x190] sm:$0xff]
  %v79 = vld [vmem:[%s1 + $0x198] sm:$0xff]
  %v80 = vld [vmem:[%s1 + $0x1a0] sm:$0xff]
  %v81 = vld [vmem:[%s1 + $0x1a8] sm:$0xff]
  %v82 = vld [vmem:[%s1 + $0x1b0] sm:$0xff]
  %v83 = vld [vmem:[%s1 + $0x1b8] sm:$0xff]
  %v84 = vld [vmem:[%s1 + $0x1c0] sm:$0xff]
  %v85 = vld [vmem:[%s1 + $0x1c8] sm:$0xff]
  %v86 = vld [vmem:[%s1 + $0x1d0] sm:$0xff]
  %v87 = vld [vmem:[%s1 + $0x1d8] sm:$0xff]
  %v88 = vld [vmem:[%s1 + $0x1e0] sm:$0xff]
  %v89 = vld [vmem:[%s1 + $0x1e8] sm:$0xff]
  %v90 = vld [vmem:[%s1 + $0x1f0] sm:$0xff]
  %v91 = vld [vmem:[%s1 + $0x1f8] sm:$0xff]
  %v92 = vld [vmem:[%s2] sm:$0xf]
  %v94 = vperm.slane %v92, 0
  %v95 = vperm.slane %v92, 1
  %v96 = vperm.slane %v92, 2
  %v97 = vperm.slane %v92, 3
  %102 = vmatpush.msra.mxu0 %v88
  %103 = vmatpush.msra.mxu0 %v84
  %104 = vmatpush.msra.mxu0 %v80
  %105 = vmatpush.msra.mxu0 %v76
  %106 = vmatpush.msra.mxu0 %v72
  %107 = vmatpush.msra.mxu0 %v68
  %108 = vmatpush.msra.mxu0 %v64
  %109 = vmatpush.msra.mxu0 %v60
  %110 = vmatpush.msra.mxu0 %v56
  %111 = vmatpush.msra.mxu0 %v52
  %112 = vmatpush.msra.mxu0 %v48
  %113 = vmatpush.msra.mxu0 %v44
  %114 = vmatpush.msra.mxu0 %v40
  %115 = vmatpush.msra.mxu0 %v36
  %116 = vmatpush.msra.mxu0 %v32
  %117 = vmatpush.msra.mxu0 %v28
  %118 = vmatmul.f32.gmra.mxu0 %v26
  %v119 = vpop.f32.mrf.mxu0
  %v120 = vadd.f32 %v94, %v119
  %121 = vmatmul.f32.gmra.mxu0 %v27
  %v122 = vpop.f32.mrf.mxu0
  %v123 = vadd.f32 %v94, %v122
  %124 = vdwg.mxu0
  %125 = vmatpush.msra.mxu0 %v89
  %126 = vmatpush.msra.mxu0 %v85
  %127 = vmatpush.msra.mxu0 %v81
  %128 = vmatpush.msra.mxu0 %v77
  %129 = vmatpush.msra.mxu0 %v73
  %130 = vmatpush.msra.mxu0 %v69
  %131 = vmatpush.msra.mxu0 %v65
  %132 = vmatpush.msra.mxu0 %v61
  %133 = vmatpush.msra.mxu0 %v57
  %134 = vmatpush.msra.mxu0 %v53
  %135 = vmatpush.msra.mxu0 %v49
  %136 = vmatpush.msra.mxu0 %v45
  %137 = vmatpush.msra.mxu0 %v41
  %138 = vmatpush.msra.mxu0 %v37
  %139 = vmatpush.msra.mxu0 %v33
  %140 = vmatpush.msra.mxu0 %v29
  %141 = vmatmul.f32.gmra.mxu0 %v26
  %v142 = vpop.f32.mrf.mxu0
  %v143 = vadd.f32 %v95, %v142
  %144 = vmatmul.f32.gmra.mxu0 %v27
  %v145 = vpop.f32.mrf.mxu0
  %v146 = vadd.f32 %v95, %v145
  %147 = vdwg.mxu0
  %148 = vmatpush.msra.mxu0 %v90
  %149 = vmatpush.msra.mxu0 %v86
  %150 = vmatpush.msra.mxu0 %v82
  %151 = vmatpush.msra.mxu0 %v78
  %152 = vmatpush.msra.mxu0 %v74
  %153 = vmatpush.msra.mxu0 %v70
  %154 = vmatpush.msra.mxu0 %v66
  %155 = vmatpush.msra.mxu0 %v62
  %156 = vmatpush.msra.mxu0 %v58
  %157 = vmatpush.msra.mxu0 %v54
  %158 = vmatpush.msra.mxu0 %v50
  %159 = vmatpush.msra.mxu0 %v46
  %160 = vmatpush.msra.mxu0 %v42
  %161 = vmatpush.msra.mxu0 %v38
  %162 = vmatpush.msra.mxu0 %v34
  %163 = vmatpush.msra.mxu0 %v30
  %164 = vmatmul.f32.gmra.mxu0 %v26
  %v165 = vpop.f32.mrf.mxu0
  %v166 = vadd.f32 %v96, %v165
  %167 = vmatmul.f32.gmra.mxu0 %v27
  %v168 = vpop.f32.mrf.mxu0
  %v169 = vadd.f32 %v96, %v168
  %170 = vdwg.mxu0
  %171 = vmatpush.msra.mxu0 %v91
  %172 = vmatpush.msra.mxu0 %v87
  %173 = vmatpush.msra.mxu0 %v83
  %174 = vmatpush.msra.mxu0 %v79
  %175 = vmatpush.msra.mxu0 %v75
  %176 = vmatpush.msra.mxu0 %v71
  %177 = vmatpush.msra.mxu0 %v67
  %178 = vmatpush.msra.mxu0 %v63
  %179 = vmatpush.msra.mxu0 %v59
  %180 = vmatpush.msra.mxu0 %v55
  %181 = vmatpush.msra.mxu0 %v51
  %182 = vmatpush.msra.mxu0 %v47
  %183 = vmatpush.msra.mxu0 %v43
  %184 = vmatpush.msra.mxu0 %v39
  %185 = vmatpush.msra.mxu0 %v35
  %186 = vmatpush.msra.mxu0 %v31
  %187 = vmatmul.f32.gmra.mxu0 %v26
  %v188 = vpop.f32.mrf.mxu0
  %v189 = vadd.f32 %v97, %v188
  %190 = vmatmul.f32.gmra.mxu0 %v27
  %v191 = vpop.f32.mrf.mxu0
  %v192 = vadd.f32 %v97, %v191
  %193 = vdwg.mxu0
  %v194 = vmax.f32 %v120, 0.0
  %v195 = vmax.f32 %v143, 0.0
  %v196 = vmax.f32 %v166, 0.0
  %v197 = vmax.f32 %v189, 0.0
  %v198 = vmax.f32 %v123, 0.0
  %v199 = vmax.f32 %v146, 0.0
  %v200 = vmax.f32 %v169, 0.0
  %v201 = vmax.f32 %v192, 0.0
  %v202 = vld [vmem:[#allocation2] sm:$0xff]
  %v203 = vld [vmem:[#allocation2 + $0x8] sm:$0xff]
  %v204 = vld [vmem:[%s3] sm:$0xff]
  %v205 = vld [vmem:[%s3 + $0x8] sm:$0xff]
  %v206 = vld [vmem:[%s3 + $0x10] sm:$0xff]
  %v207 = vld [vmem:[%s3 + $0x18] sm:$0xff]
  %v208 = vld [vmem:[%s3 + $0x20] sm:$0xff]
  %v209 = vld [vmem:[%s3 + $0x28] sm:$0xff]
  %v210 = vld [vmem:[%s3 + $0x30] sm:$0xff]
  %v211 = vld [vmem:[%s3 + $0x38] sm:$0xff]
  %v212 = vld [vmem:[%s3 + $0x40] sm:$0xff]
  %v213 = vld [vmem:[%s3 + $0x48] sm:$0xff]
  %v214 = vld [vmem:[%s3 + $0x50] sm:$0xff]
  %v215 = vld [vmem:[%s3 + $0x58] sm:$0xff]
  %v216 = vld [vmem:[%s3 + $0x60] sm:$0xff]
  %v217 = vld [vmem:[%s3 + $0x68] sm:$0xff]
  %v218 = vld [vmem:[%s3 + $0x70] sm:$0xff]
  %v219 = vld [vmem:[%s3 + $0x78] sm:$0xff]
  %v220 = vld [vmem:[%s3 + $0x80] sm:$0xff]
  %v221 = vld [vmem:[%s3 + $0x88] sm:$0xff]
  %v222 = vld [vmem:[%s3 + $0x90] sm:$0xff]
  %v223 = vld [vmem:[%s3 + $0x98] sm:$0xff]
  %v224 = vld [vmem:[%s3 + $0xa0] sm:$0xff]
  %v225 = vld [vmem:[%s3 + $0xa8] sm:$0xff]
  %v226 = vld [vmem:[%s3 + $0xb0] sm:$0xff]
  %v227 = vld [vmem:[%s3 + $0xb8] sm:$0xff]
  %v228 = vld [vmem:[%s3 + $0xc0] sm:$0xff]
  %v229 = vld [vmem:[%s3 + $0xc8] sm:$0xff]
  %v230 = vld [vmem:[%s3 + $0xd0] sm:$0xff]
  %v231 = vld [vmem:[%s3 + $0xd8] sm:$0xff]
  %v232 = vld [vmem:[%s3 + $0xe0] sm:$0xff]
  %v233 = vld [vmem:[%s3 + $0xe8] sm:$0xff]
  %v234 = vld [vmem:[%s3 + $0xf0] sm:$0xff]
  %v235 = vld [vmem:[%s3 + $0xf8] sm:$0xff]
  %v236 = vld [vmem:[%s3 + $0x100] sm:$0xff]
  %v237 = vld [vmem:[%s3 + $0x108] sm:$0xff]
  %v238 = vld [vmem:[%s3 + $0x110] sm:$0xff]
  %v239 = vld [vmem:[%s3 + $0x118] sm:$0xff]
  %v240 = vld [vmem:[%s3 + $0x120] sm:$0xff]
  %v241 = vld [vmem:[%s3 + $0x128] sm:$0xff]
  %v242 = vld [vmem:[%s3 + $0x130] sm:$0xff]
  %v243 = vld [vmem:[%s3 + $0x138] sm:$0xff]
  %v244 = vld [vmem:[%s3 + $0x140] sm:$0xff]
  %v245 = vld [vmem:[%s3 + $0x148] sm:$0xff]
  %v246 = vld [vmem:[%s3 + $0x150] sm:$0xff]
  %v247 = vld [vmem:[%s3 + $0x158] sm:$0xff]
  %v248 = vld [vmem:[%s3 + $0x160] sm:$0xff]
  %v249 = vld [vmem:[%s3 + $0x168] sm:$0xff]
  %v250 = vld [vmem:[%s3 + $0x170] sm:$0xff]
  %v251 = vld [vmem:[%s3 + $0x178] sm:$0xff]
  %v252 = vld [vmem:[%s3 + $0x180] sm:$0xff]
  %v253 = vld [vmem:[%s3 + $0x188] sm:$0xff]
  %v254 = vld [vmem:[%s3 + $0x190] sm:$0xff]
  %v255 = vld [vmem:[%s3 + $0x198] sm:$0xff]
  %v256 = vld [vmem:[%s3 + $0x1a0] sm:$0xff]
  %v257 = vld [vmem:[%s3 + $0x1a8] sm:$0xff]
  %v258 = vld [vmem:[%s3 + $0x1b0] sm:$0xff]
  %v259 = vld [vmem:[%s3 + $0x1b8] sm:$0xff]
  %v260 = vld [vmem:[%s3 + $0x1c0] sm:$0xff]
  %v261 = vld [vmem:[%s3 + $0x1c8] sm:$0xff]
  %v262 = vld [vmem:[%s3 + $0x1d0] sm:$0xff]
  %v263 = vld [vmem:[%s3 + $0x1d8] sm:$0xff]
  %v264 = vld [vmem:[%s3 + $0x1e0] sm:$0xff]
  %v265 = vld [vmem:[%s3 + $0x1e8] sm:$0xff]
  %v266 = vld [vmem:[%s3 + $0x1f0] sm:$0xff]
  %v267 = vld [vmem:[%s3 + $0x1f8] sm:$0xff]
  %268 = vmatpush.msra.mxu0 %v219
  %269 = vmatpush.msra.mxu0 %v218
  %270 = vmatpush.msra.mxu0 %v217
  %271 = vmatpush.msra.mxu0 %v216
  %272 = vmatpush.msra.mxu0 %v215
  %273 = vmatpush.msra.mxu0 %v214
  %274 = vmatpush.msra.mxu0 %v213
  %275 = vmatpush.msra.mxu0 %v212
  %276 = vmatpush.msra.mxu0 %v211
  %277 = vmatpush.msra.mxu0 %v210
  %278 = vmatpush.msra.mxu0 %v209
  %279 = vmatpush.msra.mxu0 %v208
  %280 = vmatpush.msra.mxu0 %v207
  %281 = vmatpush.msra.mxu0 %v206
  %282 = vmatpush.msra.mxu0 %v205
  %283 = vmatpush.msra.mxu0 %v204
  %284 = vmatmul.f32.gmra.mxu0 %v194
  %v285 = vpop.f32.mrf.mxu0
  %v286 = vadd.f32 0.0, %v285
  %287 = vmatmul.f32.gmra.mxu0 %v198
  %v288 = vpop.f32.mrf.mxu0
  %v289 = vadd.f32 0.0, %v288
  %290 = vdwg.mxu0
  %291 = vmatpush.msra.mxu0 %v235
  %292 = vmatpush.msra.mxu0 %v234
  %293 = vmatpush.msra.mxu0 %v233
  %294 = vmatpush.msra.mxu0 %v232
  %295 = vmatpush.msra.mxu0 %v231
  %296 = vmatpush.msra.mxu0 %v230
  %297 = vmatpush.msra.mxu0 %v229
  %298 = vmatpush.msra.mxu0 %v228
  %299 = vmatpush.msra.mxu0 %v227
  %300 = vmatpush.msra.mxu0 %v226
  %301 = vmatpush.msra.mxu0 %v225
  %302 = vmatpush.msra.mxu0 %v224
  %303 = vmatpush.msra.mxu0 %v223
  %304 = vmatpush.msra.mxu0 %v222
  %305 = vmatpush.msra.mxu0 %v221
  %306 = vmatpush.msra.mxu0 %v220
  %307 = vmatmul.f32.gmra.mxu0 %v195
  %v308 = vpop.f32.mrf.mxu0
  %v309 = vadd.f32 %v286, %v308
  %310 = vmatmul.f32.gmra.mxu0 %v199
  %v311 = vpop.f32.mrf.mxu0
  %v312 = vadd.f32 %v289, %v311
  %313 = vdwg.mxu0
  %314 = vmatpush.msra.mxu0 %v251
  %315 = vmatpush.msra.mxu0 %v250
  %316 = vmatpush.msra.mxu0 %v249
  %317 = vmatpush.msra.mxu0 %v248
  %318 = vmatpush.msra.mxu0 %v247
  %319 = vmatpush.msra.mxu0 %v246
  %320 = vmatpush.msra.mxu0 %v245
  %321 = vmatpush.msra.mxu0 %v244
  %322 = vmatpush.msra.mxu0 %v243
  %323 = vmatpush.msra.mxu0 %v242
  %324 = vmatpush.msra.mxu0 %v241
  %325 = vmatpush.msra.mxu0 %v240
  %326 = vmatpush.msra.mxu0 %v239
  %327 = vmatpush.msra.mxu0 %v238
  %328 = vmatpush.msra.mxu0 %v237
  %329 = vmatpush.msra.mxu0 %v236
  %330 = vmatmul.f32.gmra.mxu0 %v196
  %v331 = vpop.f32.mrf.mxu0
  %v332 = vadd.f32 %v309, %v331
  %333 = vmatmul.f32.gmra.mxu0 %v200
  %v334 = vpop.f32.mrf.mxu0
  %v335 = vadd.f32 %v312, %v334
  %336 = vdwg.mxu0
  %337 = vmatpush.msra.mxu0 %v267
  %338 = vmatpush.msra.mxu0 %v266
  %339 = vmatpush.msra.mxu0 %v265
  %340 = vmatpush.msra.mxu0 %v264
  %341 = vmatpush.msra.mxu0 %v263
  %342 = vmatpush.msra.mxu0 %v262
  %343 = vmatpush.msra.mxu0 %v261
  %344 = vmatpush.msra.mxu0 %v260
  %345 = vmatpush.msra.mxu0 %v259
  %346 = vmatpush.msra.mxu0 %v258
  %347 = vmatpush.msra.mxu0 %v257
  %348 = vmatpush.msra.mxu0 %v256
  %349 = vmatpush.msra.mxu0 %v255
  %350 = vmatpush.msra.mxu0 %v254
  %351 = vmatpush.msra.mxu0 %v253
  %352 = vmatpush.msra.mxu0 %v252
  %353 = vmatmul.f32.gmra.mxu0 %v197
  %v354 = vpop.f32.mrf.mxu0
  %v355 = vadd.f32 %v332, %v354
  %356 = vmatmul.f32.gmra.mxu0 %v201
  %v357 = vpop.f32.mrf.mxu0
  %v358 = vadd.f32 %v335, %v357
  %359 = vdwg.mxu0
  %v360 = vadd.f32 %v202, %v355
  %v361 = vadd.f32 %v203, %v358
  %362 = vst [vmem:[#allocation2] sm:$0xff] %v360
  %363 = vst [vmem:[#allocation2 + $0x8] sm:$0xff] %v361
  // Predicated region
  $region26: #{feed_forward.1} parent=0 // pred_check
    %p364 = pneg %p20
  $region27: #{feed_forward.1} parent=0 // pred_check_branch
    %366 = sbr.rel (%p364) target = $region29
  $region28: #{feed_forward.1} parent=0 // pred_region
    %v367 = vld [vmem:[#allocation2] sm:$0xff]
    %v368 = vld [vmem:[#allocation2 + $0x8] sm:$0xff]
    %v369 = vld [vmem:[%s4] sm:$0x1]
    %v371 = vperm.slane %v369, 0
    %v373 = vadd.f32 %v367, %v371
    %v374 = vadd.f32 %v368, %v371
    %375 = vst [vmem:[%s5] sm:$0xff] %v373
    %376 = vst [vmem:[%s5 + $0x8] sm:$0xff] %v374
  $region29: #{feed_forward.1} parent=0 // pred_fallthru
    _
  // Predicated region
  $region30: #{feed_forward.1} parent=0 // pred_check
    _
  $region31: #{feed_forward.1} parent=0 // pred_check_branch
    %378 = sbr.rel (0) target = $region33
  $region32: #{feed_forward.1} parent=0 // pred_region
    _
  $region33: #{feed_forward.1} parent=0 // pred_fallthru
    _
  // Predicated region
  $region34: #{feed_forward.1} parent=0 // pred_check
    _
  $region35: #{feed_forward.1} parent=0 // pred_check_branch
    %380 = sbr.rel (0) target = $region37
  $region36: #{feed_forward.1} parent=0 // pred_region
    _
  $region37: #{feed_forward.1} parent=0 // pred_fallthru
    _

</llo_original>
